<compile_context>
chip_gen: v7x
topology: tpu7x:2x2x1
jax: 0.10.0
libtpu: 0.0.40
codegen_flags: <defaults>
</compile_context>

<pallas_src>
import jax
import jax.numpy as jnp
from jax.experimental import pallas as pl
from jax.experimental.pallas import tpu as pltpu

EPS = 1e-5  # nn.BatchNorm2d default eps
C = 3       # Net expects 3 input channels


def input_a_concat_kernel(x_ref, w1_ref, w2_ref, s1_ref, b1_ref, b2_ref, out_ref):
    """Fused inputA + concat on one (C, rows, 128) slab.

    x_ref:  VMEM (C, rows, 128) f32
    w1_ref: SMEM (C, C)  -- conv1 weight with BN2 scale pre-folded into its rows
    w2_ref: SMEM (C, C)  -- conv2 weight
    s1_ref, b1_ref: SMEM (C,) -- folded BN1 scale/shift
    b2_ref:         SMEM (C,) -- folded BN2 shift
    out_ref: VMEM (2C, rows, 128) f32 == concat([x, y], channel axis)
    """
    x = x_ref[...]                       # (C, rows, 128)
    out_ref[0:C] = x                     # pass-through half of the concat

    # BN1 (folded scale/shift) + ReLU, per channel.
    h = [jnp.maximum(x[c] * s1_ref[c] + b1_ref[c], 0.0) for c in range(C)]

    # conv1 (1x1, BN2 scale folded) + BN2 shift + ReLU: unrolled scalar-broadcast FMAs.
    g = []
    for o in range(C):
        t = w1_ref[o, 0] * h[0] + w1_ref[o, 1] * h[1] + w1_ref[o, 2] * h[2] + b2_ref[o]
        g.append(jnp.maximum(t, 0.0))

    # conv2 (1x1): unrolled FMAs, stored directly into the second half of the output.
    for o in range(C):
        out_ref[C + o] = w2_ref[o, 0] * g[0] + w2_ref[o, 1] * g[1] + w2_ref[o, 2] * g[2]


def _choose_rows(total_rows, target):
    """Largest divisor of total_rows that is <= target, preferring multiples of 8."""
    best, best8 = 1, 0
    for d in range(1, min(total_rows, target) + 1):
        if total_rows % d == 0:
            best = d
            if d % 8 == 0:
                best8 = d
    return best8 if best8 else best


def fold_params(w1, w2, g1, be1, m1, v1, g2, be2, m2, v2):
    """Fold the two BatchNorms (eval mode); fold BN2's scale into W1's rows."""
    s1 = g1 / jnp.sqrt(v1 + EPS)
    b1 = be1 - m1 * s1
    s2 = g2 / jnp.sqrt(v2 + EPS)
    b2 = be2 - m2 * s2
    w1f = s2[:, None] * w1              # (O, I): scale each output row by BN2 scale
    return w1f, w2, s1, b1, b2


def net_forward(x_nchw, folded, target_rows=512):
    """inputA + concat (Pallas) + final flatten. NCHW in, (N, 2*C*H*W) out."""
    w1f, w2, s1, b1, b2 = folded
    N, Cin, H, W = x_nchw.shape
    assert Cin == C, "Net expects 3 input channels"
    P = H * W
    P_pad = ((P + 127) // 128) * 128

    x_flat = x_nchw.reshape(N, C, P).astype(jnp.float32)
    if P_pad != P:
        x_flat = jnp.pad(x_flat, ((0, 0), (0, 0), (0, P_pad - P)))
    R = P_pad // 128
    rows = _choose_rows(R, target_rows)

    x4 = x_flat.reshape(N, C, R, 128)    # free reshape: native NCHW order

    out4 = pl.pallas_call(
        input_a_concat_kernel,
        out_shape=jax.ShapeDtypeStruct((N, 2 * C, R, 128), jnp.float32),
        grid_spec=pltpu.PrefetchScalarGridSpec(
            num_scalar_prefetch=0,
            grid=(N, R // rows),
            in_specs=[
                pl.BlockSpec((None, C, rows, 128), lambda n, i: (n, 0, i, 0)),  # x slab
                pl.BlockSpec(memory_space=pltpu.MemorySpace.SMEM),              # W1 (BN2-folded)
                pl.BlockSpec(memory_space=pltpu.MemorySpace.SMEM),              # W2
                pl.BlockSpec(memory_space=pltpu.MemorySpace.SMEM),              # BN1 scale
                pl.BlockSpec(memory_space=pltpu.MemorySpace.SMEM),              # BN1 shift
                pl.BlockSpec(memory_space=pltpu.MemorySpace.SMEM),              # BN2 shift
            ],
            out_specs=pl.BlockSpec((None, 2 * C, rows, 128), lambda n, i: (n, 0, i, 0)),
        ),
        compiler_params=pltpu.CompilerParams(
            dimension_semantics=("parallel", "parallel")),
    )(x4, w1f, w2, s1, b1, b2)

    out = out4.reshape(N, 2 * C, P_pad)
    if P_pad != P:
        out = out[:, :, :P]
    # TODO(synk): self.features (BC_conv / DC_Bn4 / BC_sPool) would be applied here;
    # its building blocks are undefined in the provided source.
    return out.reshape(N, -1)


def ref_forward(x_nchw, raw):
    """Pure-JAX reference of inputA + concat + flatten (eval-mode BN)."""
    w1, w2, g1, be1, m1, v1, g2, be2, m2, v2 = raw

    def bn(x, g, b, m, v):
        g, b, m, v = (t[None, :, None, None] for t in (g, b, m, v))
        return (x - m) / jnp.sqrt(v + EPS) * g + b

    h = jnp.maximum(bn(x_nchw, g1, be1, m1, v1), 0.0)
    h = jnp.einsum("oi,nihw->nohw", w1, h)
    h = jnp.maximum(bn(h, g2, be2, m2, v2), 0.0)
    y = jnp.einsum("oi,nihw->nohw", w2, h)
    out = jnp.concatenate([x_nchw, y], axis=1)
    return out.reshape(x_nchw.shape[0], -1)


def make_params(key):
    ks = jax.random.split(key, 10)
    # Conv2d(3,3,1,bias=False) weights, torch shape (O,I,1,1) -> (O,I)
    w1 = jax.random.normal(ks[0], (C, C), jnp.float32) * 0.5
    w2 = jax.random.normal(ks[1], (C, C), jnp.float32) * 0.5
    # BatchNorm2d(3) x2: gamma, beta, running_mean, running_var (eval-mode stats)
    g1 = 1.0 + 0.1 * jax.random.normal(ks[2], (C,), jnp.float32)
    be1 = 0.1 * jax.random.normal(ks[3], (C,), jnp.float32)
    m1 = 0.1 * jax.random.normal(ks[4], (C,), jnp.float32)
    v1 = 0.5 + jnp.abs(jax.random.normal(ks[5], (C,), jnp.float32))
    g2 = 1.0 + 0.1 * jax.random.normal(ks[6], (C,), jnp.float32)
    be2 = 0.1 * jax.random.normal(ks[7], (C,), jnp.float32)
    m2 = 0.1 * jax.random.normal(ks[8], (C,), jnp.float32)
    v2 = 0.5 + jnp.abs(jax.random.normal(ks[9], (C,), jnp.float32))
    raw = (w1, w2, g1, be1, m1, v1, g2, be2, m2, v2)
    folded = fold_params(*raw)
    return folded, raw


if __name__ == "__main__":
    key = jax.random.PRNGKey(0)
    kx, kp = jax.random.split(key)

    N, H, W = 2, 16, 16                 # small NCHW input (H*W = 256 -> 2 lane rows)
    x = jax.random.normal(kx, (N, C, H, W), jnp.float32)

    folded, raw = make_params(kp)

    out = jax.jit(lambda x: net_forward(x, folded))(x)
    out = jax.block_until_ready(out)

    ref = ref_forward(x, raw)
    assert out.shape == (N, 2 * C * H * W), out.shape
    assert jnp.allclose(out, ref, atol=1e-4, rtol=1e-4), float(jnp.max(jnp.abs(out - ref)))

    print("KERNEL_OK")
</pallas_src>

<mosaic_0001>
module attributes {stable_mosaic.version = 11 : i64} {
  func.func @input_a_concat_kernel(%arg0: i32, %arg1: i32, %arg2: memref<1x3x2x128xf32, #tpu.memory_space<vmem>>, %arg3: memref<3x3xf32, #tpu.memory_space<smem>>, %arg4: memref<3x3xf32, #tpu.memory_space<smem>>, %arg5: memref<3xf32, #tpu.memory_space<smem>>, %arg6: memref<3xf32, #tpu.memory_space<smem>>, %arg7: memref<3xf32, #tpu.memory_space<smem>>, %arg8: memref<1x6x2x128xf32, #tpu.memory_space<vmem>>) attributes {dimension_semantics = [#tpu.dimension_semantics<parallel>, #tpu.dimension_semantics<parallel>], iteration_bounds = array<i64: 2, 1>, scalar_prefetch = 0 : i64, scratch_operands = 0 : i64, tpu.core_type = #tpu.core_type<tc>, window_params = [{transform_indices = @transform_0, window_bounds = array<i64: 1, 3, 2, 128>}, {transform_indices = @transform_1, window_bounds = array<i64: 3, 3>}, {transform_indices = @transform_2, window_bounds = array<i64: 3, 3>}, {transform_indices = @transform_3, window_bounds = array<i64: 3>}, {transform_indices = @transform_4, window_bounds = array<i64: 3>}, {transform_indices = @transform_5, window_bounds = array<i64: 3>}, {transform_indices = @transform_6, window_bounds = array<i64: 1, 6, 2, 128>}]} {
    %c0 = arith.constant 0 : index
    %c0_0 = arith.constant 0 : index
    %c0_1 = arith.constant 0 : index
    %c0_2 = arith.constant 0 : index
    %0 = vector.load %arg2[%c0, %c0_0, %c0_1, %c0_2] : memref<1x3x2x128xf32, #tpu.memory_space<vmem>>, vector<1x3x2x128xf32>
    %1 = vector.shape_cast %0 : vector<1x3x2x128xf32> to vector<3x2x128xf32>
    %c0_3 = arith.constant 0 : index
    %c0_4 = arith.constant 0 : index
    %c0_5 = arith.constant 0 : index
    %c0_6 = arith.constant 0 : index
    %2 = vector.load %arg8[%c0_3, %c0_4, %c0_5, %c0_6] : memref<1x6x2x128xf32, #tpu.memory_space<vmem>>, vector<1x3x2x128xf32>
    %3 = vector.shape_cast %2 : vector<1x3x2x128xf32> to vector<3x2x128xf32>
    %4 = vector.shape_cast %1 : vector<3x2x128xf32> to vector<1x3x2x128xf32>
    tpu.vector_store %arg8[%c0_3, %c0_4, %c0_5, %c0_6], %4 {strides = array<i32>} : memref<1x6x2x128xf32, #tpu.memory_space<vmem>>, vector<1x3x2x128xf32>,
    %5 = vector.extract_strided_slice %1 {offsets = [0, 0, 0], sizes = [1, 2, 128], strides = [1, 1, 1]} : vector<3x2x128xf32> to vector<1x2x128xf32>
    %6 = vector.shape_cast %5 : vector<1x2x128xf32> to vector<2x128xf32>
    %c0_7 = arith.constant 0 : index
    %7 = memref.load %arg5[%c0_7] : memref<3xf32, #tpu.memory_space<smem>>
    %8 = vector.broadcast %7 : f32 to vector<2x128xf32>
    %9 = arith.mulf %6, %8 : vector<2x128xf32>
    %c0_8 = arith.constant 0 : index
    %10 = memref.load %arg6[%c0_8] : memref<3xf32, #tpu.memory_space<smem>>
    %11 = vector.broadcast %10 : f32 to vector<2x128xf32>
    %12 = arith.addf %9, %11 : vector<2x128xf32>
    %cst = arith.constant 0.000000e+00 : f32
    %13 = vector.broadcast %cst : f32 to vector<2x128xf32>
    %14 = arith.maximumf %12, %13 : vector<2x128xf32>
    %15 = vector.extract_strided_slice %1 {offsets = [1, 0, 0], sizes = [1, 2, 128], strides = [1, 1, 1]} : vector<3x2x128xf32> to vector<1x2x128xf32>
    %16 = vector.shape_cast %15 : vector<1x2x128xf32> to vector<2x128xf32>
    %c1 = arith.constant 1 : index
    %17 = memref.load %arg5[%c1] : memref<3xf32, #tpu.memory_space<smem>>
    %18 = vector.broadcast %17 : f32 to vector<2x128xf32>
    %19 = arith.mulf %16, %18 : vector<2x128xf32>
    %c1_9 = arith.constant 1 : index
    %20 = memref.load %arg6[%c1_9] : memref<3xf32, #tpu.memory_space<smem>>
    %21 = vector.broadcast %20 : f32 to vector<2x128xf32>
    %22 = arith.addf %19, %21 : vector<2x128xf32>
    %cst_10 = arith.constant 0.000000e+00 : f32
    %23 = vector.broadcast %cst_10 : f32 to vector<2x128xf32>
    %24 = arith.maximumf %22, %23 : vector<2x128xf32>
    %25 = vector.extract_strided_slice %1 {offsets = [2, 0, 0], sizes = [1, 2, 128], strides = [1, 1, 1]} : vector<3x2x128xf32> to vector<1x2x128xf32>
    %26 = vector.shape_cast %25 : vector<1x2x128xf32> to vector<2x128xf32>
    %c2 = arith.constant 2 : index
    %27 = memref.load %arg5[%c2] : memref<3xf32, #tpu.memory_space<smem>>
    %28 = vector.broadcast %27 : f32 to vector<2x128xf32>
    %29 = arith.mulf %26, %28 : vector<2x128xf32>
    %c2_11 = arith.constant 2 : index
    %30 = memref.load %arg6[%c2_11] : memref<3xf32, #tpu.memory_space<smem>>
    %31 = vector.broadcast %30 : f32 to vector<2x128xf32>
    %32 = arith.addf %29, %31 : vector<2x128xf32>
    %cst_12 = arith.constant 0.000000e+00 : f32
    %33 = vector.broadcast %cst_12 : f32 to vector<2x128xf32>
    %34 = arith.maximumf %32, %33 : vector<2x128xf32>
    %c0_13 = arith.constant 0 : index
    %c0_14 = arith.constant 0 : index
    %35 = memref.load %arg3[%c0_13, %c0_14] : memref<3x3xf32, #tpu.memory_space<smem>>
    %36 = vector.broadcast %35 : f32 to vector<2x128xf32>
    %37 = arith.mulf %36, %14 : vector<2x128xf32>
    %c0_15 = arith.constant 0 : index
    %c1_16 = arith.constant 1 : index
    %38 = memref.load %arg3[%c0_15, %c1_16] : memref<3x3xf32, #tpu.memory_space<smem>>
    %39 = vector.broadcast %38 : f32 to vector<2x128xf32>
    %40 = arith.mulf %39, %24 : vector<2x128xf32>
    %41 = arith.addf %37, %40 : vector<2x128xf32>
    %c0_17 = arith.constant 0 : index
    %c2_18 = arith.constant 2 : index
    %42 = memref.load %arg3[%c0_17, %c2_18] : memref<3x3xf32, #tpu.memory_space<smem>>
    %43 = vector.broadcast %42 : f32 to vector<2x128xf32>
    %44 = arith.mulf %43, %34 : vector<2x128xf32>
    %45 = arith.addf %41, %44 : vector<2x128xf32>
    %c0_19 = arith.constant 0 : index
    %46 = memref.load %arg7[%c0_19] : memref<3xf32, #tpu.memory_space<smem>>
    %47 = vector.broadcast %46 : f32 to vector<2x128xf32>
    %48 = arith.addf %45, %47 : vector<2x128xf32>
    %cst_20 = arith.constant 0.000000e+00 : f32
    %49 = vector.broadcast %cst_20 : f32 to vector<2x128xf32>
    %50 = arith.maximumf %48, %49 : vector<2x128xf32>
    %c1_21 = arith.constant 1 : index
    %c0_22 = arith.constant 0 : index
    %51 = memref.load %arg3[%c1_21, %c0_22] : memref<3x3xf32, #tpu.memory_space<smem>>
    %52 = vector.broadcast %51 : f32 to vector<2x128xf32>
    %53 = arith.mulf %52, %14 : vector<2x128xf32>
    %c1_23 = arith.constant 1 : index
    %c1_24 = arith.constant 1 : index
    %54 = memref.load %arg3[%c1_23, %c1_24] : memref<3x3xf32, #tpu.memory_space<smem>>
    %55 = vector.broadcast %54 : f32 to vector<2x128xf32>
    %56 = arith.mulf %55, %24 : vector<2x128xf32>
    %57 = arith.addf %53, %56 : vector<2x128xf32>
    %c1_25 = arith.constant 1 : index
    %c2_26 = arith.constant 2 : index
    %58 = memref.load %arg3[%c1_25, %c2_26] : memref<3x3xf32, #tpu.memory_space<smem>>
    %59 = vector.broadcast %58 : f32 to vector<2x128xf32>
    %60 = arith.mulf %59, %34 : vector<2x128xf32>
    %61 = arith.addf %57, %60 : vector<2x128xf32>
    %c1_27 = arith.constant 1 : index
    %62 = memref.load %arg7[%c1_27] : memref<3xf32, #tpu.memory_space<smem>>
    %63 = vector.broadcast %62 : f32 to vector<2x128xf32>
    %64 = arith.addf %61, %63 : vector<2x128xf32>
    %cst_28 = arith.constant 0.000000e+00 : f32
    %65 = vector.broadcast %cst_28 : f32 to vector<2x128xf32>
    %66 = arith.maximumf %64, %65 : vector<2x128xf32>
    %c2_29 = arith.constant 2 : index
    %c0_30 = arith.constant 0 : index
    %67 = memref.load %arg3[%c2_29, %c0_30] : memref<3x3xf32, #tpu.memory_space<smem>>
    %68 = vector.broadcast %67 : f32 to vector<2x128xf32>
    %69 = arith.mulf %68, %14 : vector<2x128xf32>
    %c2_31 = arith.constant 2 : index
    %c1_32 = arith.constant 1 : index
    %70 = memref.load %arg3[%c2_31, %c1_32] : memref<3x3xf32, #tpu.memory_space<smem>>
    %71 = vector.broadcast %70 : f32 to vector<2x128xf32>
    %72 = arith.mulf %71, %24 : vector<2x128xf32>
    %73 = arith.addf %69, %72 : vector<2x128xf32>
    %c2_33 = arith.constant 2 : index
    %c2_34 = arith.constant 2 : index
    %74 = memref.load %arg3[%c2_33, %c2_34] : memref<3x3xf32, #tpu.memory_space<smem>>
    %75 = vector.broadcast %74 : f32 to vector<2x128xf32>
    %76 = arith.mulf %75, %34 : vector<2x128xf32>
    %77 = arith.addf %73, %76 : vector<2x128xf32>
    %c2_35 = arith.constant 2 : index
    %78 = memref.load %arg7[%c2_35] : memref<3xf32, #tpu.memory_space<smem>>
    %79 = vector.broadcast %78 : f32 to vector<2x128xf32>
    %80 = arith.addf %77, %79 : vector<2x128xf32>
    %cst_36 = arith.constant 0.000000e+00 : f32
    %81 = vector.broadcast %cst_36 : f32 to vector<2x128xf32>
    %82 = arith.maximumf %80, %81 : vector<2x128xf32>
    %c0_37 = arith.constant 0 : index
    %c0_38 = arith.constant 0 : index
    %83 = memref.load %arg4[%c0_37, %c0_38] : memref<3x3xf32, #tpu.memory_space<smem>>
    %84 = vector.broadcast %83 : f32 to vector<2x128xf32>
    %85 = arith.mulf %84, %50 : vector<2x128xf32>
    %c0_39 = arith.constant 0 : index
    %c1_40 = arith.constant 1 : index
    %86 = memref.load %arg4[%c0_39, %c1_40] : memref<3x3xf32, #tpu.memory_space<smem>>
    %87 = vector.broadcast %86 : f32 to vector<2x128xf32>
    %88 = arith.mulf %87, %66 : vector<2x128xf32>
    %89 = arith.addf %85, %88 : vector<2x128xf32>
    %c0_41 = arith.constant 0 : index
    %c2_42 = arith.constant 2 : index
    %90 = memref.load %arg4[%c0_41, %c2_42] : memref<3x3xf32, #tpu.memory_space<smem>>
    %91 = vector.broadcast %90 : f32 to vector<2x128xf32>
    %92 = arith.mulf %91, %82 : vector<2x128xf32>
    %93 = arith.addf %89, %92 : vector<2x128xf32>
    %c0_43 = arith.constant 0 : index
    %c3 = arith.constant 3 : index
    %c0_44 = arith.constant 0 : index
    %c0_45 = arith.constant 0 : index
    %94 = vector.load %arg8[%c0_43, %c3, %c0_44, %c0_45] : memref<1x6x2x128xf32, #tpu.memory_space<vmem>>, vector<1x1x2x128xf32>
    %95 = vector.shape_cast %94 : vector<1x1x2x128xf32> to vector<2x128xf32>
    %96 = vector.shape_cast %93 : vector<2x128xf32> to vector<1x1x2x128xf32>
    tpu.vector_store %arg8[%c0_43, %c3, %c0_44, %c0_45], %96 {strides = array<i32>} : memref<1x6x2x128xf32, #tpu.memory_space<vmem>>, vector<1x1x2x128xf32>,
    %c1_46 = arith.constant 1 : index
    %c0_47 = arith.constant 0 : index
    %97 = memref.load %arg4[%c1_46, %c0_47] : memref<3x3xf32, #tpu.memory_space<smem>>
    %98 = vector.broadcast %97 : f32 to vector<2x128xf32>
    %99 = arith.mulf %98, %50 : vector<2x128xf32>
    %c1_48 = arith.constant 1 : index
    %c1_49 = arith.constant 1 : index
    %100 = memref.load %arg4[%c1_48, %c1_49] : memref<3x3xf32, #tpu.memory_space<smem>>
    %101 = vector.broadcast %100 : f32 to vector<2x128xf32>
    %102 = arith.mulf %101, %66 : vector<2x128xf32>
    %103 = arith.addf %99, %102 : vector<2x128xf32>
    %c1_50 = arith.constant 1 : index
    %c2_51 = arith.constant 2 : index
    %104 = memref.load %arg4[%c1_50, %c2_51] : memref<3x3xf32, #tpu.memory_space<smem>>
    %105 = vector.broadcast %104 : f32 to vector<2x128xf32>
    %106 = arith.mulf %105, %82 : vector<2x128xf32>
    %107 = arith.addf %103, %106 : vector<2x128xf32>
    %c0_52 = arith.constant 0 : index
    %c4 = arith.constant 4 : index
    %c0_53 = arith.constant 0 : index
    %c0_54 = arith.constant 0 : index
    %108 = vector.load %arg8[%c0_52, %c4, %c0_53, %c0_54] : memref<1x6x2x128xf32, #tpu.memory_space<vmem>>, vector<1x1x2x128xf32>
    %109 = vector.shape_cast %108 : vector<1x1x2x128xf32> to vector<2x128xf32>
    %110 = vector.shape_cast %107 : vector<2x128xf32> to vector<1x1x2x128xf32>
    tpu.vector_store %arg8[%c0_52, %c4, %c0_53, %c0_54], %110 {strides = array<i32>} : memref<1x6x2x128xf32, #tpu.memory_space<vmem>>, vector<1x1x2x128xf32>,
    %c2_55 = arith.constant 2 : index
    %c0_56 = arith.constant 0 : index
    %111 = memref.load %arg4[%c2_55, %c0_56] : memref<3x3xf32, #tpu.memory_space<smem>>
    %112 = vector.broadcast %111 : f32 to vector<2x128xf32>
    %113 = arith.mulf %112, %50 : vector<2x128xf32>
    %c2_57 = arith.constant 2 : index
    %c1_58 = arith.constant 1 : index
    %114 = memref.load %arg4[%c2_57, %c1_58] : memref<3x3xf32, #tpu.memory_space<smem>>
    %115 = vector.broadcast %114 : f32 to vector<2x128xf32>
    %116 = arith.mulf %115, %66 : vector<2x128xf32>
    %117 = arith.addf %113, %116 : vector<2x128xf32>
    %c2_59 = arith.constant 2 : index
    %c2_60 = arith.constant 2 : index
    %118 = memref.load %arg4[%c2_59, %c2_60] : memref<3x3xf32, #tpu.memory_space<smem>>
    %119 = vector.broadcast %118 : f32 to vector<2x128xf32>
    %120 = arith.mulf %119, %82 : vector<2x128xf32>
    %121 = arith.addf %117, %120 : vector<2x128xf32>
    %c0_61 = arith.constant 0 : index
    %c5 = arith.constant 5 : index
    %c0_62 = arith.constant 0 : index
    %c0_63 = arith.constant 0 : index
    %122 = vector.load %arg8[%c0_61, %c5, %c0_62, %c0_63] : memref<1x6x2x128xf32, #tpu.memory_space<vmem>>, vector<1x1x2x128xf32>
    %123 = vector.shape_cast %122 : vector<1x1x2x128xf32> to vector<2x128xf32>
    %124 = vector.shape_cast %121 : vector<2x128xf32> to vector<1x1x2x128xf32>
    tpu.vector_store %arg8[%c0_61, %c5, %c0_62, %c0_63], %124 {strides = array<i32>} : memref<1x6x2x128xf32, #tpu.memory_space<vmem>>, vector<1x1x2x128xf32>,
    return
  }
  func.func @transform_0(%arg0: i32, %arg1: i32) -> (i32, i32, i32, i32) {
    %c0_i32 = arith.constant 0 : i32
    %c0_i32_0 = arith.constant 0 : i32
    %c0_i32_1 = arith.constant 0 : i32
    return %arg0, %c0_i32, %arg1, %c0_i32_0 : i32, i32, i32, i32
  }
  func.func @transform_1(%arg0: i32, %arg1: i32) -> (i32, i32) {
    %c0_i32 = arith.constant 0 : i32
    %c0_i32_0 = arith.constant 0 : i32
    %c0_i32_1 = arith.constant 0 : i32
    return %c0_i32, %c0_i32_0 : i32, i32
  }
  func.func @transform_2(%arg0: i32, %arg1: i32) -> (i32, i32) {
    %c0_i32 = arith.constant 0 : i32
    %c0_i32_0 = arith.constant 0 : i32
    %c0_i32_1 = arith.constant 0 : i32
    return %c0_i32, %c0_i32_0 : i32, i32
  }
  func.func @transform_3(%arg0: i32, %arg1: i32) -> i32 {
    %c0_i32 = arith.constant 0 : i32
    %c0_i32_0 = arith.constant 0 : i32
    return %c0_i32 : i32
  }
  func.func @transform_4(%arg0: i32, %arg1: i32) -> i32 {
    %c0_i32 = arith.constant 0 : i32
    %c0_i32_0 = arith.constant 0 : i32
    return %c0_i32 : i32
  }
  func.func @transform_5(%arg0: i32, %arg1: i32) -> i32 {
    %c0_i32 = arith.constant 0 : i32
    %c0_i32_0 = arith.constant 0 : i32
    return %c0_i32 : i32
  }
  func.func @transform_6(%arg0: i32, %arg1: i32) -> (i32, i32, i32, i32) {
    %c0_i32 = arith.constant 0 : i32
    %c0_i32_0 = arith.constant 0 : i32
    %c0_i32_1 = arith.constant 0 : i32
    return %arg0, %c0_i32, %arg1, %c0_i32_0 : i32, i32, i32, i32
  }
}

</mosaic_0001>

<llo_original>
// kernel: _lambda_.1
$region0: #{_lambda_.1}
  #allocation0 [shape = 'u32[]', space=smem, size = 0x4, offset = 0x4, fixed_abs, tag = 'smem constant byte address 0x4 - core index']
  #allocation1 [shape = 'u32[144,128]{1,0:T(1,128)}', space=vmem, size = 0x12000, scoped, tag = 'internal scratch']
  %s0 = inlined_call_operand.vmem [shape: f32[2,3,2,128], index: 0, kind: input, shape index: {}]
  %s1 = inlined_call_operand.vmem [shape: f32[3,3], index: 1, kind: input, shape index: {}]
  %s2 = inlined_call_operand.vmem [shape: f32[3,3], index: 2, kind: input, shape index: {}]
  %s3 = inlined_call_operand.vmem [shape: f32[3], index: 3, kind: input, shape index: {}]
  %s4 = inlined_call_operand.vmem [shape: f32[3], index: 4, kind: input, shape index: {}]
  %s5 = inlined_call_operand.vmem [shape: f32[3], index: 5, kind: input, shape index: {}]
  %s6 = inlined_call_operand.vmem [shape: f32[2,6,2,128], index: 6, kind: output, shape index: {}]
  %s7 = sld [smem:[#allocation0]]
  $region77: #{_lambda_.1} parent=0
    _
  %s9 = ssub.s32 1, %s7
  %s10 = scalar_select 0, %s9, %s7
  $region1: #{_lambda_.1} parent=0
    #allocation2 [shape = 'u8[2048]{0}', space=smem, size = 0x800, scoped, tag = 'input window, operand 1, single buffered']
    #allocation3 [shape = 's32[2]{0}', space=sflag, size = 0x8, scoped, tag = 'scoped memory for _lambda_.1']
    #allocation4 [shape = 'u8[2048]{0}', space=smem, size = 0x800, scoped, tag = 'input window, operand 2, single buffered']
    #allocation5 [shape = 's32[1]{0}', space=sflag, size = 0x4, scoped, tag = 'scoped memory for _lambda_.1']
    #allocation6 [shape = 'u8[512]{0}', space=smem, size = 0x200, scoped, tag = 'input window, operand 3, single buffered']
    #allocation7 [shape = 'u8[512]{0}', space=smem, size = 0x200, scoped, tag = 'input window, operand 4, single buffered']
    #allocation8 [shape = 's32[1]{0}', space=sflag, size = 0x4, scoped, tag = 'scoped memory for _lambda_.1']
    #allocation9 [shape = 'u8[512]{0}', space=smem, size = 0x200, scoped, tag = 'input window, operand 5, single buffered']
    %11 = vsyncpa [#allocation3], 0
    %12 = vsyncpa [#allocation5], 0
    %13 = vsyncpa [#allocation8], 0
    loop: start=0, step=1, limit=4
    $region2: #{_lambda_.1} parent=1 // loop_pre_header
      _
    $region3: #{_lambda_.1} parent=1 // loop_header
      %s15 = sphi 0, %s19
      %p16 = scmp.ge.s32.totalorder %s15, 4
      %s22 = sphi 0, %s34
      %s23 = sphi 0, %s30
      %s24 = sphi 0, %s22
      %s25 = sphi 0, %s23
      %s26 = sphi 0, %s24
      %s27 = sphi 0, %s25
      %s39 = sphi 0, %s41
      %s42 = sphi 0, %s39
      %s43 = sphi 0, %s42
      %s59 = sphi 0, %s43
      %s63 = sphi 0, %s63
      %s65 = sphi 0, %s63
      %s66 = sphi 0, %s65
      %s80 = sphi 0, %s66
      %s84 = sphi 0, %s84
      %s86 = sphi 0, %s84
      %s87 = sphi 0, %s86
      %s101 = sphi 0, %s87
      %s105 = sphi 0, %s105
      %s107 = sphi 0, %s105
      %s108 = sphi 0, %s107
      %s122 = sphi 0, %s108
      %s126 = sphi 0, %s126
      %s128 = sphi 0, %s126
      %s129 = sphi 0, %s128
      %s143 = sphi 0, %s129
      %s147 = sphi 0, %s147
      %s149 = sphi 0, %s147
      %s150 = sphi 0, %s149
      %s164 = sphi 0, %s150
      %s172 = sphi 0, %s174
      %s175 = sphi 0, %s172
      %s176 = sphi 0, %s175
      %s192 = sphi 0, %s176
    $region4: #{_lambda_.1} parent=1 // loop_header_branch
      %18 = sbr.rel (%p16) target = $region8
    $region5: #{_lambda_.1} parent=1 // loop_body
      %s20 = ssub.s32 %s15, 1
      %s21 = ssub.s32 %s15, 2
      %s28 = sadd.s32 1, %s23
      %p29 = scmp.ge.s32.totalorder %s28, 1
      %s30 = scalar_select %p29, 0, %s28
      %s31 = sadd.s32 1, %s22
      %s32 = scalar_select %p29, %s31, %s22
      %p33 = scmp.ge.s32.totalorder %s32, 2
      %s34 = scalar_select %p33, 0, %s32
      %s35 = ssub.s32 %s22, %s34
      %s36 = ssub.s32 %s23, %s30
      %s37 = sor.u32 %s35, %s36
      %p38 = scmp.eq.s32.totalorder %s37, 0
      %s40 = sadd.s32 %s39, 1
      %s41 = scalar_select %p38, %s39, %s40
      %p44 = pneg %p38
      %p45 = scmp.eq.s32.totalorder %s15, 1
      %p46 = por %p44, %p45
      %p47 = scmp.ne.s32.totalorder %s39, %s42
      %p48 = scmp.eq.s32.totalorder %s15, 0
      %p49 = por %p47, %p48
      %p50 = scmp.ne.s32.totalorder %s39, %s42
      %p51 = scmp.eq.s32.totalorder %s20, 1
      %p52 = por %p50, %p51
      %p53 = scmp.ne.s32.totalorder %s42, %s43
      %p54 = scmp.eq.s32.totalorder %s20, 0
      %p55 = por %p53, %p54
      %p56 = scmp.ne.s32.totalorder %s42, %s43
      %p57 = scmp.eq.s32.totalorder %s21, 1
      %p58 = por %p56, %p57
      %p60 = scmp.ne.s32.totalorder %s43, %s59
      %p61 = scmp.eq.s32.totalorder %s21, 0
      %p62 = por %p60, %p61
      %s64 = sadd.s32 %s63, 1
      %p67 = scmp.eq.s32.totalorder %s15, 1
      %p68 = scmp.ne.s32.totalorder %s63, %s65
      %p69 = scmp.eq.s32.totalorder %s15, 0
      %p70 = por %p68, %p69
      %p71 = scmp.ne.s32.totalorder %s63, %s65
      %p72 = scmp.eq.s32.totalorder %s20, 1
      %p73 = por %p71, %p72
      %p74 = scmp.ne.s32.totalorder %s65, %s66
      %p75 = scmp.eq.s32.totalorder %s20, 0
      %p76 = por %p74, %p75
      %p77 = scmp.ne.s32.totalorder %s65, %s66
      %p78 = scmp.eq.s32.totalorder %s21, 1
      %p79 = por %p77, %p78
      %p81 = scmp.ne.s32.totalorder %s66, %s80
      %p82 = scmp.eq.s32.totalorder %s21, 0
      %p83 = por %p81, %p82
      %s85 = sadd.s32 %s84, 1
      %p88 = scmp.eq.s32.totalorder %s15, 1
      %p89 = scmp.ne.s32.totalorder %s84, %s86
      %p90 = scmp.eq.s32.totalorder %s15, 0
      %p91 = por %p89, %p90
      %p92 = scmp.ne.s32.totalorder %s84, %s86
      %p93 = scmp.eq.s32.totalorder %s20, 1
      %p94 = por %p92, %p93
      %p95 = scmp.ne.s32.totalorder %s86, %s87
      %p96 = scmp.eq.s32.totalorder %s20, 0
      %p97 = por %p95, %p96
      %p98 = scmp.ne.s32.totalorder %s86, %s87
      %p99 = scmp.eq.s32.totalorder %s21, 1
      %p100 = por %p98, %p99
      %p102 = scmp.ne.s32.totalorder %s87, %s101
      %p103 = scmp.eq.s32.totalorder %s21, 0
      %p104 = por %p102, %p103
      %s106 = sadd.s32 %s105, 1
      %p109 = scmp.eq.s32.totalorder %s15, 1
      %p110 = scmp.ne.s32.totalorder %s105, %s107
      %p111 = scmp.eq.s32.totalorder %s15, 0
      %p112 = por %p110, %p111
      %p113 = scmp.ne.s32.totalorder %s105, %s107
      %p114 = scmp.eq.s32.totalorder %s20, 1
      %p115 = por %p113, %p114
      %p116 = scmp.ne.s32.totalorder %s107, %s108
      %p117 = scmp.eq.s32.totalorder %s20, 0
      %p118 = por %p116, %p117
      %p119 = scmp.ne.s32.totalorder %s107, %s108
      %p120 = scmp.eq.s32.totalorder %s21, 1
      %p121 = por %p119, %p120
      %p123 = scmp.ne.s32.totalorder %s108, %s122
      %p124 = scmp.eq.s32.totalorder %s21, 0
      %p125 = por %p123, %p124
      %s127 = sadd.s32 %s126, 1
      %p130 = scmp.eq.s32.totalorder %s15, 1
      %p131 = scmp.ne.s32.totalorder %s126, %s128
      %p132 = scmp.eq.s32.totalorder %s15, 0
      %p133 = por %p131, %p132
      %p134 = scmp.ne.s32.totalorder %s126, %s128
      %p135 = scmp.eq.s32.totalorder %s20, 1
      %p136 = por %p134, %p135
      %p137 = scmp.ne.s32.totalorder %s128, %s129
      %p138 = scmp.eq.s32.totalorder %s20, 0
      %p139 = por %p137, %p138
      %p140 = scmp.ne.s32.totalorder %s128, %s129
      %p141 = scmp.eq.s32.totalorder %s21, 1
      %p142 = por %p140, %p141
      %p144 = scmp.ne.s32.totalorder %s129, %s143
      %p145 = scmp.eq.s32.totalorder %s21, 0
      %p146 = por %p144, %p145
      %s148 = sadd.s32 %s147, 1
      %p151 = scmp.eq.s32.totalorder %s15, 1
      %p152 = scmp.ne.s32.totalorder %s147, %s149
      %p153 = scmp.eq.s32.totalorder %s15, 0
      %p154 = por %p152, %p153
      %p155 = scmp.ne.s32.totalorder %s147, %s149
      %p156 = scmp.eq.s32.totalorder %s20, 1
      %p157 = por %p155, %p156
      %p158 = scmp.ne.s32.totalorder %s149, %s150
      %p159 = scmp.eq.s32.totalorder %s20, 0
      %p160 = por %p158, %p159
      %p161 = scmp.ne.s32.totalorder %s149, %s150
      %p162 = scmp.eq.s32.totalorder %s21, 1
      %p163 = por %p161, %p162
      %p165 = scmp.ne.s32.totalorder %s150, %s164
      %p166 = scmp.eq.s32.totalorder %s21, 0
      %p167 = por %p165, %p166
      %s168 = ssub.s32 %s22, %s34
      %s169 = ssub.s32 %s23, %s30
      %s170 = sor.u32 %s168, %s169
      %p171 = scmp.eq.s32.totalorder %s170, 0
      %s173 = sadd.s32 %s172, 1
      %s174 = scalar_select %p171, %s172, %s173
      %p177 = pneg %p171
      %p178 = scmp.eq.s32.totalorder %s15, 1
      %p179 = por %p177, %p178
      %p180 = scmp.ne.s32.totalorder %s172, %s175
      %p181 = scmp.eq.s32.totalorder %s15, 0
      %p182 = por %p180, %p181
      %p183 = scmp.ne.s32.totalorder %s172, %s175
      %p184 = scmp.eq.s32.totalorder %s20, 1
      %p185 = por %p183, %p184
      %p186 = scmp.ne.s32.totalorder %s175, %s176
      %p187 = scmp.eq.s32.totalorder %s20, 0
      %p188 = por %p186, %p187
      %p189 = scmp.ne.s32.totalorder %s175, %s176
      %p190 = scmp.eq.s32.totalorder %s21, 1
      %p191 = por %p189, %p190
      %p193 = scmp.ne.s32.totalorder %s176, %s192
      %p194 = scmp.eq.s32.totalorder %s21, 0
      %p195 = por %p193, %p194
      %p196 = scmp.le.s32.totalorder 1, %s15
      %p197 = scmp.lt.s32.totalorder %s15, 3
      %p198 = pnand %p196, %p197
      %p199 = pneg %p198
      // Predicated region
      $region9: #{_lambda_.1} parent=5 // pred_check
        _
      $region10: #{_lambda_.1} parent=5 // pred_check_branch
        %201 = sbr.rel (%p198) target = $region12
      $region11: #{_lambda_.1} parent=5 // pred_region
        %s202 = ssub.s32 %s15, 1
        // Predicated region
        $region13: #{_lambda_.1} parent=11 // pred_check
          %p203 = pneg %p76
        $region14: #{_lambda_.1} parent=11 // pred_check_branch
          %205 = sbr.rel (%p203) target = $region16
        $region15: #{_lambda_.1} parent=11 // pred_region
          %s207 = ssub.s32 64, 64
          %208 = vsyncadd [#allocation3], %s207
          %s210 = sshll.u32 %s1, 4
          %s211 = int_to_ptr.vmem [resolvable:$true] %s210
          %213 = dma.vmem_to_smem %s211, 64, [#allocation2], [#allocation3]
        $region16: #{_lambda_.1} parent=11 // pred_fallthru
          _
        // Predicated region
        $region17: #{_lambda_.1} parent=11 // pred_check
          %p214 = pneg %p97
        $region18: #{_lambda_.1} parent=11 // pred_check_branch
          %216 = sbr.rel (%p214) target = $region20
        $region19: #{_lambda_.1} parent=11 // pred_region
          %s218 = ssub.s32 64, 64
          %219 = vsyncadd [#allocation5], %s218
          %s221 = sshll.u32 %s2, 4
          %s222 = int_to_ptr.vmem [resolvable:$true] %s221
          %224 = dma.vmem_to_smem %s222, 64, [#allocation4], [#allocation5]
        $region20: #{_lambda_.1} parent=11 // pred_fallthru
          _
        // Predicated region
        $region21: #{_lambda_.1} parent=11 // pred_check
          %p225 = pneg %p118
        $region22: #{_lambda_.1} parent=11 // pred_check_branch
          %227 = sbr.rel (%p225) target = $region24
        $region23: #{_lambda_.1} parent=11 // pred_region
          %s229 = ssub.s32 16, 16
          %230 = vsyncadd [#allocation5], %s229
          %s232 = sshll.u32 %s3, 4
          %s233 = int_to_ptr.vmem [resolvable:$true] %s232
          %235 = dma.vmem_to_smem %s233, 16, [#allocation6], [#allocation5]
        $region24: #{_lambda_.1} parent=11 // pred_fallthru
          _
        // Predicated region
        $region25: #{_lambda_.1} parent=11 // pred_check
          %p236 = pneg %p139
        $region26: #{_lambda_.1} parent=11 // pred_check_branch
          %238 = sbr.rel (%p236) target = $region28
        $region27: #{_lambda_.1} parent=11 // pred_region
          %s240 = ssub.s32 16, 16
          %241 = vsyncadd [#allocation8], %s240
          %s243 = sshll.u32 %s4, 4
          %s244 = int_to_ptr.vmem [resolvable:$true] %s243
          %246 = dma.vmem_to_smem %s244, 16, [#allocation7], [#allocation8]
        $region28: #{_lambda_.1} parent=11 // pred_fallthru
          _
        // Predicated region
        $region29: #{_lambda_.1} parent=11 // pred_check
          %p247 = pneg %p160
        $region30: #{_lambda_.1} parent=11 // pred_check_branch
          %249 = sbr.rel (%p247) target = $region32
        $region31: #{_lambda_.1} parent=11 // pred_region
          %s251 = ssub.s32 16, 16
          %252 = vsyncadd [#allocation8], %s251
          %s254 = sshll.u32 %s5, 4
          %s255 = int_to_ptr.vmem [resolvable:$true] %s254
          %257 = dma.vmem_to_smem %s255, 16, [#allocation9], [#allocation8]
        $region32: #{_lambda_.1} parent=11 // pred_fallthru
          _
      $region12: #{_lambda_.1} parent=5 // pred_fallthru
        _
      %p258 = scmp.lt.s32.totalorder %s15, 2
      // Predicated region
      $region33: #{_lambda_.1} parent=5 // pred_check
        %p259 = pneg %p258
      $region34: #{_lambda_.1} parent=5 // pred_check_branch
        %261 = sbr.rel (%p259) target = $region36
      $region35: #{_lambda_.1} parent=5 // pred_region
        // Predicated region
        $region37: #{_lambda_.1} parent=35 // pred_check
          %p262 = pneg %p49
        $region38: #{_lambda_.1} parent=35 // pred_check_branch
          %264 = sbr.rel (%p262) target = $region40
        $region39: #{_lambda_.1} parent=35 // pred_region
          %p265 = scmp.lt.s32.totalorder %s22, 1
          %s266 = scalar_select %p265, %s22, 1
          %p267 = scmp.lt.s32.totalorder %s23, 0
          %s268 = scalar_select %p267, %s23, 0
          %s269 = smul.addr %s266, 3
          %s270 = sadd.s32 %s268, %s269
          %s271 = smul.addr %s270, 2
          %s272 = scalar_lea.vmem %s0, %s271
        $region40: #{_lambda_.1} parent=35 // pred_fallthru
          _
      $region36: #{_lambda_.1} parent=5 // pred_fallthru
        _
      %p273 = scmp.le.s32.totalorder 1, %s15
      %p274 = scmp.lt.s32.totalorder %s15, 3
      %p275 = pnand %p273, %p274
      %p276 = pneg %p275
      // Predicated region
      $region41: #{_lambda_.1} parent=5 // pred_check
        _
      $region42: #{_lambda_.1} parent=5 // pred_check_branch
        %278 = sbr.rel (%p275) target = $region44
      $region43: #{_lambda_.1} parent=5 // pred_region
        %s279 = ssub.s32 %s15, 1
        // Predicated region
        $region45: #{_lambda_.1} parent=43 // pred_check
          %p280 = pneg %p76
        $region46: #{_lambda_.1} parent=43 // pred_check_branch
          %282 = sbr.rel (%p280) target = $region48
        $region47: #{_lambda_.1} parent=43 // pred_region
          %283 = dma.done [#allocation3], 64
        $region48: #{_lambda_.1} parent=43 // pred_fallthru
          _
        // Predicated region
        $region49: #{_lambda_.1} parent=43 // pred_check
          %p284 = pneg %p97
        $region50: #{_lambda_.1} parent=43 // pred_check_branch
          %286 = sbr.rel (%p284) target = $region52
        $region51: #{_lambda_.1} parent=43 // pred_region
          %287 = dma.done [#allocation5], 64
        $region52: #{_lambda_.1} parent=43 // pred_fallthru
          _
        // Predicated region
        $region53: #{_lambda_.1} parent=43 // pred_check
          %p288 = pneg %p118
        $region54: #{_lambda_.1} parent=43 // pred_check_branch
          %290 = sbr.rel (%p288) target = $region56
        $region55: #{_lambda_.1} parent=43 // pred_region
          %291 = dma.done [#allocation5], 16
        $region56: #{_lambda_.1} parent=43 // pred_fallthru
          _
        // Predicated region
        $region57: #{_lambda_.1} parent=43 // pred_check
          %p292 = pneg %p139
        $region58: #{_lambda_.1} parent=43 // pred_check_branch
          %294 = sbr.rel (%p292) target = $region60
        $region59: #{_lambda_.1} parent=43 // pred_region
          %295 = dma.done [#allocation8], 16
        $region60: #{_lambda_.1} parent=43 // pred_fallthru
          _
        // Predicated region
        $region61: #{_lambda_.1} parent=43 // pred_check
          %p296 = pneg %p160
        $region62: #{_lambda_.1} parent=43 // pred_check_branch
          %298 = sbr.rel (%p296) target = $region64
        $region63: #{_lambda_.1} parent=43 // pred_region
          %299 = dma.done [#allocation8], 16
        $region64: #{_lambda_.1} parent=43 // pred_fallthru
          _
        %300 = sfence
        %p301 = scmp.lt.s32.totalorder %s24, 1
        %s302 = scalar_select %p301, %s24, 1
        %p303 = scmp.lt.s32.totalorder %s25, 0
        %s304 = scalar_select %p303, %s25, 0
        %s305 = smul.addr %s302, 3
        %s306 = sadd.s32 %s304, %s305
        %s307 = smul.addr %s306, 2
        %s308 = scalar_lea.vmem %s0, %s307
        %p309 = pneg %p55
        %p310 = pneg %p52
        %p311 = pneg %p76
        %p312 = pneg %p73
        %p313 = pneg %p97
        %p314 = pneg %p94
        %p315 = pneg %p118
        %p316 = pneg %p115
        %p317 = pneg %p139
        %p318 = pneg %p136
        %p319 = pneg %p160
        %p320 = pneg %p157
        %p321 = pneg %p188
        %p322 = pneg %p185
        %p323 = scmp.lt.s32.totalorder %s24, 1
        %s324 = scalar_select %p323, %s24, 1
        %p325 = scmp.lt.s32.totalorder %s25, 0
        %s326 = scalar_select %p325, %s25, 0
        %s327 = smul.addr %s324, 6
        %s328 = sadd.s32 %s326, %s327
        %s329 = smul.addr %s328, 2
        %s330 = scalar_lea.vmem %s6, %s329
        %p331 = scmp.lt.s32.totalorder %s24, 1
        %s332 = scalar_select %p331, %s24, 1
        %p333 = scmp.lt.s32.totalorder %s25, 0
        %s334 = scalar_select %p333, %s25, 0
        %s335 = smul.addr %s332, 3
        %s336 = sadd.s32 %s334, %s335
        %s337 = smul.addr %s336, 2
        %s338 = scalar_lea.vmem %s0, %s337
        %p339 = scmp.lt.s32.totalorder %s24, 1
        %s340 = scalar_select %p339, %s24, 1
        %p341 = scmp.lt.s32.totalorder %s25, 0
        %s342 = scalar_select %p341, %s25, 0
        %s343 = smul.addr %s340, 6
        %s344 = sadd.s32 %s342, %s343
        %s345 = smul.addr %s344, 2
        %s346 = scalar_lea.vmem %s6, %s345
        %v347 = vld [vmem:[%s338] sm:$0x3]
        %v348 = vld [vmem:[%s338 + $0x2] sm:$0x3]
        %v349 = vld [vmem:[%s338 + $0x4] sm:$0x3]
        %350 = vst [vmem:[%s346] sm:$0x3] %v347
        %351 = vst [vmem:[%s346 + $0x2] sm:$0x3] %v348
        %352 = vst [vmem:[%s346 + $0x4] sm:$0x3] %v349
        %s353 = sld [smem:[#allocation6]]
        %v354 = vstv %s353
        %v355 = vmul.f32 %v347, %v354
        %s356 = sld [smem:[#allocation7]]
        %v357 = vstv %s356
        %v358 = vadd.f32 %v355, %v357
        %v359 = vmax.f32 %v358, 0.0
        %s360 = sld [smem:[#allocation6 + $0x1]]
        %v361 = vstv %s360
        %v362 = vmul.f32 %v348, %v361
        %s363 = sld [smem:[#allocation7 + $0x1]]
        %v364 = vstv %s363
        %v365 = vadd.f32 %v362, %v364
        %v366 = vmax.f32 %v365, 0.0
        %s367 = sld [smem:[#allocation6 + $0x2]]
        %v368 = vstv %s367
        %v369 = vmul.f32 %v349, %v368
        %s370 = sld [smem:[#allocation7 + $0x2]]
        %v371 = vstv %s370
        %v372 = vadd.f32 %v369, %v371
        %v373 = vmax.f32 %v372, 0.0
        %s374 = sld [smem:[#allocation2]]
        %v375 = vstv %s374
        %v376 = vmul.f32 %v375, %v359
        %s377 = sld [smem:[#allocation2 + $0x1]]
        %v378 = vstv %s377
        %v379 = vmul.f32 %v378, %v366
        %v380 = vadd.f32 %v376, %v379
        %s381 = sld [smem:[#allocation2 + $0x2]]
        %v382 = vstv %s381
        %v383 = vmul.f32 %v382, %v373
        %v384 = vadd.f32 %v380, %v383
        %s385 = sld [smem:[#allocation9]]
        %v386 = vstv %s385
        %v387 = vadd.f32 %v384, %v386
        %v388 = vmax.f32 %v387, 0.0
        %s389 = sld [smem:[#allocation2 + $0x80]]
        %v390 = vstv %s389
        %v391 = vmul.f32 %v390, %v359
        %s392 = sld [smem:[#allocation2 + $0x81]]
        %v393 = vstv %s392
        %v394 = vmul.f32 %v393, %v366
        %v395 = vadd.f32 %v391, %v394
        %s396 = sld [smem:[#allocation2 + $0x82]]
        %v397 = vstv %s396
        %v398 = vmul.f32 %v397, %v373
        %v399 = vadd.f32 %v395, %v398
        %s400 = sld [smem:[#allocation9 + $0x1]]
        %v401 = vstv %s400
        %v402 = vadd.f32 %v399, %v401
        %v403 = vmax.f32 %v402, 0.0
        %s404 = sld [smem:[#allocation2 + $0x100]]
        %v405 = vstv %s404
        %v406 = vmul.f32 %v405, %v359
        %s407 = sld [smem:[#allocation2 + $0x101]]
        %v408 = vstv %s407
        %v409 = vmul.f32 %v408, %v366
        %v410 = vadd.f32 %v406, %v409
        %s411 = sld [smem:[#allocation2 + $0x102]]
        %v412 = vstv %s411
        %v413 = vmul.f32 %v412, %v373
        %v414 = vadd.f32 %v410, %v413
        %s415 = sld [smem:[#allocation9 + $0x2]]
        %v416 = vstv %s415
        %v417 = vadd.f32 %v414, %v416
        %v418 = vmax.f32 %v417, 0.0
        %s419 = sld [smem:[#allocation4]]
        %v420 = vstv %s419
        %v421 = vmul.f32 %v420, %v388
        %s422 = sld [smem:[#allocation4 + $0x1]]
        %v423 = vstv %s422
        %v424 = vmul.f32 %v423, %v403
        %v425 = vadd.f32 %v421, %v424
        %s426 = sld [smem:[#allocation4 + $0x2]]
        %v427 = vstv %s426
        %v428 = vmul.f32 %v427, %v418
        %v429 = vadd.f32 %v425, %v428
        %s430 = scalar_lea.vmem %s346, 6
        %431 = vst [vmem:[%s430] sm:$0x3] %v429
        %s432 = sld [smem:[#allocation4 + $0x80]]
        %v433 = vstv %s432
        %v434 = vmul.f32 %v433, %v388
        %s435 = sld [smem:[#allocation4 + $0x81]]
        %v436 = vstv %s435
        %v437 = vmul.f32 %v436, %v403
        %v438 = vadd.f32 %v434, %v437
        %s439 = sld [smem:[#allocation4 + $0x82]]
        %v440 = vstv %s439
        %v441 = vmul.f32 %v440, %v418
        %v442 = vadd.f32 %v438, %v441
        %s443 = scalar_lea.vmem %s346, 8
        %444 = vst [vmem:[%s443] sm:$0x3] %v442
        %s445 = sld [smem:[#allocation4 + $0x100]]
        %v446 = vstv %s445
        %v447 = vmul.f32 %v446, %v388
        %s448 = sld [smem:[#allocation4 + $0x101]]
        %v449 = vstv %s448
        %v450 = vmul.f32 %v449, %v403
        %v451 = vadd.f32 %v447, %v450
        %s452 = sld [smem:[#allocation4 + $0x102]]
        %v453 = vstv %s452
        %v454 = vmul.f32 %v453, %v418
        %v455 = vadd.f32 %v451, %v454
        %s456 = scalar_lea.vmem %s346, 10
        %457 = vst [vmem:[%s456] sm:$0x3] %v455
        %p458 = scmp.lt.s32.totalorder %s24, 1
        %s459 = scalar_select %p458, %s24, 1
        %p460 = scmp.lt.s32.totalorder %s25, 0
        %s461 = scalar_select %p460, %s25, 0
        %s462 = smul.addr %s459, 6
        %s463 = sadd.s32 %s461, %s462
        %s464 = smul.addr %s463, 2
        %s465 = scalar_lea.vmem %s6, %s464
        // Predicated region
        $region65: #{_lambda_.1} parent=43 // pred_check
          %p466 = pneg %p185
        $region66: #{_lambda_.1} parent=43 // pred_check_branch
          %468 = sbr.rel (%p466) target = $region68
        $region67: #{_lambda_.1} parent=43 // pred_region
          _
        $region68: #{_lambda_.1} parent=43 // pred_fallthru
          _
      $region44: #{_lambda_.1} parent=5 // pred_fallthru
        _
      %p469 = scmp.le.s32.totalorder 2, %s15
      // Predicated region
      $region69: #{_lambda_.1} parent=5 // pred_check
        %p470 = pneg %p469
      $region70: #{_lambda_.1} parent=5 // pred_check_branch
        %472 = sbr.rel (%p470) target = $region72
      $region71: #{_lambda_.1} parent=5 // pred_region
        %s473 = ssub.s32 %s15, 2
        // Predicated region
        $region73: #{_lambda_.1} parent=71 // pred_check
          %p474 = pneg %p191
        $region74: #{_lambda_.1} parent=71 // pred_check_branch
          %476 = sbr.rel (%p474) target = $region76
        $region75: #{_lambda_.1} parent=71 // pred_region
          %p477 = scmp.lt.s32.totalorder %s26, 1
          %s478 = scalar_select %p477, %s26, 1
          %p479 = scmp.lt.s32.totalorder %s27, 0
          %s480 = scalar_select %p479, %s27, 0
          %s481 = smul.addr %s478, 6
          %s482 = sadd.s32 %s480, %s481
          %s483 = smul.addr %s482, 2
          %s484 = scalar_lea.vmem %s6, %s483
        $region76: #{_lambda_.1} parent=71 // pred_fallthru
          _
      $region72: #{_lambda_.1} parent=5 // pred_fallthru
        _
    $region6: #{_lambda_.1} parent=1 // loop_footer
      %s19 = sadd.s32 1, %s15
    $region7: #{_lambda_.1} parent=1 // loop_footer_branch
      %14 = sbr.rel target = $region3
    $region8: #{_lambda_.1} parent=1 // loop_exit
      _
    %485 = vsyncpa [#allocation3], 1
    %s486 = scalar_lea.sflag [#allocation3], 1
    %487 = vsyncpa %s486, 1
    %488 = vsyncpa [#allocation5], 1
    %489 = vsyncpa [#allocation8], 1

</llo_original>
